<compile_context>
chip_gen: v7x
topology: tpu7x:2x2x1
jax: 0.10.0
libtpu: 0.0.40
codegen_flags: <defaults>
</compile_context>

<pallas_src>
import jax
import jax.numpy as jnp
from jax.experimental import pallas as pl
from jax.experimental.pallas import tpu as pltpu


def _round_up(x, m):
    return ((x + m - 1) // m) * m


def _pad2(a, rows, cols):
    r, c = a.shape
    return jnp.pad(a, ((0, rows - r), (0, cols - c)))


def mlp_kernel(x_ref, w1_ref, b1_ref, w2_ref, b2_ref, w3_ref, b3_ref, o_ref):
    # fc1 -> relu    (bf16 x bf16 matmul on MXU, f32 accumulation/epilogue)
    h1 = jnp.dot(x_ref[...], w1_ref[...], preferred_element_type=jnp.float32)
    h1 = jnp.maximum(h1 + b1_ref[...], 0.0)
    # fc2 -> relu
    h2 = jnp.dot(h1.astype(w2_ref.dtype), w2_ref[...],
                 preferred_element_type=jnp.float32)
    h2 = jnp.maximum(h2 + b2_ref[...], 0.0)
    # fc3 -> relu  (output padded to 128 lanes => unmasked, lane-dense stores)
    h3 = jnp.dot(h2.astype(w3_ref.dtype), w3_ref[...],
                 preferred_element_type=jnp.float32)
    o_ref[...] = jnp.maximum(h3 + b3_ref[...], 0.0).astype(o_ref.dtype)


def mlp_forward(x, w1, b1, w2, b2, w3, b3, *, block_b=512):
    B, K = x.shape
    h1_dim, h2_dim, out_dim = w1.shape[1], w2.shape[1], w3.shape[1]

    # Pad all feature dims to lane width (128) so every tile is lane-dense.
    H1 = _round_up(h1_dim, 128)
    H2 = _round_up(h2_dim, 128)
    OUT = _round_up(out_dim, 128)

    w1p = _pad2(w1, K, H1).astype(jnp.bfloat16)
    b1p = _pad2(b1, 1, H1).astype(jnp.float32)
    w2p = _pad2(w2, H1, H2).astype(jnp.bfloat16)
    b2p = _pad2(b2, 1, H2).astype(jnp.float32)
    w3p = _pad2(w3, H2, OUT).astype(jnp.bfloat16)
    b3p = _pad2(b3, 1, OUT).astype(jnp.float32)

    # Batch tile: >=512 rows when the batch is large (pipelining / MXU fill),
    # otherwise the whole (8-row-aligned) batch in one step.
    TB = min(block_b, _round_up(B, 8))
    Bp = _round_up(B, TB)
    xp = jnp.pad(x, ((0, Bp - B), (0, 0))).astype(jnp.bfloat16)

    grid = (pl.cdiv(Bp, TB),)

    out = pl.pallas_call(
        mlp_kernel,
        out_shape=jax.ShapeDtypeStruct((Bp, OUT), jnp.float32),
        grid=grid,
        in_specs=[
            # x: tiled along batch, pipelined.
            pl.BlockSpec((TB, K), lambda i: (i, 0)),
            # weights / biases: constant index_map -> VMEM-resident, fetched once.
            pl.BlockSpec((K, H1), lambda i: (0, 0)),
            pl.BlockSpec((1, H1), lambda i: (0, 0)),
            pl.BlockSpec((H1, H2), lambda i: (0, 0)),
            pl.BlockSpec((1, H2), lambda i: (0, 0)),
            pl.BlockSpec((H2, OUT), lambda i: (0, 0)),
            pl.BlockSpec((1, OUT), lambda i: (0, 0)),
        ],
        out_specs=pl.BlockSpec((TB, OUT), lambda i: (i, 0)),
        compiler_params=pltpu.CompilerParams(
            # Batch tiles are independent -> shard across v7x's 2 TensorCores.
            dimension_semantics=("parallel",),
        ),
    )(xp, w1p, b1p, w2p, b2p, w3p, b3p)

    # Strip batch padding and the lane padding of the final layer.
    return out[:B, :out_dim]


def init_linear(key, in_features, out_features):
    # PyTorch nn.Linear default init: U(-1/sqrt(in), 1/sqrt(in)) for W and b.
    kw, kb = jax.random.split(key)
    bound = 1.0 / jnp.sqrt(jnp.float32(in_features))
    # Stored already transposed: [in_features, out_features].
    w = jax.random.uniform(kw, (in_features, out_features), jnp.float32,
                           minval=-bound, maxval=bound)
    b = jax.random.uniform(kb, (1, out_features), jnp.float32,
                           minval=-bound, maxval=bound)
    return w, b


def ref_forward(x, w1, b1, w2, b2, w3, b3):
    # Same numeric path as the kernel: bf16 operands into the dot, f32 accumulate.
    xb = x.astype(jnp.bfloat16)
    h1 = jnp.maximum(
        jnp.dot(xb, w1.astype(jnp.bfloat16), preferred_element_type=jnp.float32) + b1, 0.0)
    h2 = jnp.maximum(
        jnp.dot(h1.astype(jnp.bfloat16), w2.astype(jnp.bfloat16),
                preferred_element_type=jnp.float32) + b2, 0.0)
    h3 = jnp.maximum(
        jnp.dot(h2.astype(jnp.bfloat16), w3.astype(jnp.bfloat16),
                preferred_element_type=jnp.float32) + b3, 0.0)
    return h3


if __name__ == "__main__":
    seq_len, h_f1, h_f2 = 8, 32, 32
    in_features = 50 * seq_len  # 400
    batch = 4

    key = jax.random.PRNGKey(0)
    kx, k1, k2, k3 = jax.random.split(key, 4)

    x = jax.random.normal(kx, (batch, in_features), jnp.float32)
    w1, b1 = init_linear(k1, in_features, h_f1)
    w2, b2 = init_linear(k2, h_f1, h_f2)
    w3, b3 = init_linear(k3, h_f2, 2)

    out = mlp_forward(x, w1, b1, w2, b2, w3, b3)
    out = jax.block_until_ready(out)

    ref = ref_forward(x, w1, b1, w2, b2, w3, b3)
    assert out.shape == (batch, 2)
    assert jnp.allclose(out, ref, atol=1e-3, rtol=1e-3), (
        f"max abs err {jnp.max(jnp.abs(out - ref))}")

    print("KERNEL_OK")
</pallas_src>

<mosaic_0001>
module attributes {stable_mosaic.version = 11 : i64} {
  func.func @mlp_kernel(%arg0: i32, %arg1: memref<8x400xbf16, #tpu.memory_space<vmem>>, %arg2: memref<400x128xbf16, #tpu.memory_space<vmem>>, %arg3: memref<1x128xf32, #tpu.memory_space<vmem>>, %arg4: memref<128x128xbf16, #tpu.memory_space<vmem>>, %arg5: memref<1x128xf32, #tpu.memory_space<vmem>>, %arg6: memref<128x128xbf16, #tpu.memory_space<vmem>>, %arg7: memref<1x128xf32, #tpu.memory_space<vmem>>, %arg8: memref<8x128xf32, #tpu.memory_space<vmem>>) attributes {dimension_semantics = [#tpu.dimension_semantics<parallel>], iteration_bounds = array<i64: 1>, scalar_prefetch = 0 : i64, scratch_operands = 0 : i64, tpu.core_type = #tpu.core_type<tc>, window_params = [{transform_indices = @transform_0, window_bounds = array<i64: 8, 400>}, {pipeline_mode = #tpu.pipeline_mode<synchronous>, transform_indices = @transform_1, window_bounds = array<i64: 400, 128>}, {pipeline_mode = #tpu.pipeline_mode<synchronous>, transform_indices = @transform_2, window_bounds = array<i64: 1, 128>}, {pipeline_mode = #tpu.pipeline_mode<synchronous>, transform_indices = @transform_3, window_bounds = array<i64: 128, 128>}, {pipeline_mode = #tpu.pipeline_mode<synchronous>, transform_indices = @transform_4, window_bounds = array<i64: 1, 128>}, {pipeline_mode = #tpu.pipeline_mode<synchronous>, transform_indices = @transform_5, window_bounds = array<i64: 128, 128>}, {pipeline_mode = #tpu.pipeline_mode<synchronous>, transform_indices = @transform_6, window_bounds = array<i64: 1, 128>}, {transform_indices = @transform_7, window_bounds = array<i64: 8, 128>}]} {
    %c0 = arith.constant 0 : index
    %c0_0 = arith.constant 0 : index
    %0 = vector.load %arg1[%c0, %c0_0] : memref<8x400xbf16, #tpu.memory_space<vmem>>, vector<8x400xbf16>
    %c0_1 = arith.constant 0 : index
    %c0_2 = arith.constant 0 : index
    %1 = vector.load %arg2[%c0_1, %c0_2] : memref<400x128xbf16, #tpu.memory_space<vmem>>, vector<400x128xbf16>
    %cst = arith.constant dense<0.000000e+00> : vector<8x128xf32>
    %2 = tpu.matmul %0, %1, %cst {dimension_numbers = #tpu.dot_dimension_numbers<[1], [0], [0], [1], [0, 0, 1, 1], [], []>} : vector<8x400xbf16>, vector<400x128xbf16>, vector<8x128xf32> -> vector<8x128xf32>
    %c0_3 = arith.constant 0 : index
    %c0_4 = arith.constant 0 : index
    %3 = vector.load %arg3[%c0_3, %c0_4] : memref<1x128xf32, #tpu.memory_space<vmem>>, vector<1x128xf32>
    %4 = vector.broadcast %3 : vector<1x128xf32> to vector<8x128xf32>
    %5 = arith.addf %2, %4 : vector<8x128xf32>
    %cst_5 = arith.constant 0.000000e+00 : f32
    %6 = vector.broadcast %cst_5 : f32 to vector<8x128xf32>
    %7 = arith.maximumf %5, %6 : vector<8x128xf32>
    %8 = arith.truncf %7 : vector<8x128xf32> to vector<8x128xbf16>
    %c0_6 = arith.constant 0 : index
    %c0_7 = arith.constant 0 : index
    %9 = vector.load %arg4[%c0_6, %c0_7] : memref<128x128xbf16, #tpu.memory_space<vmem>>, vector<128x128xbf16>
    %cst_8 = arith.constant dense<0.000000e+00> : vector<8x128xf32>
    %10 = tpu.matmul %8, %9, %cst_8 {dimension_numbers = #tpu.dot_dimension_numbers<[1], [0], [0], [1], [0, 0, 1, 1], [], []>} : vector<8x128xbf16>, vector<128x128xbf16>, vector<8x128xf32> -> vector<8x128xf32>
    %c0_9 = arith.constant 0 : index
    %c0_10 = arith.constant 0 : index
    %11 = vector.load %arg5[%c0_9, %c0_10] : memref<1x128xf32, #tpu.memory_space<vmem>>, vector<1x128xf32>
    %12 = vector.broadcast %11 : vector<1x128xf32> to vector<8x128xf32>
    %13 = arith.addf %10, %12 : vector<8x128xf32>
    %cst_11 = arith.constant 0.000000e+00 : f32
    %14 = vector.broadcast %cst_11 : f32 to vector<8x128xf32>
    %15 = arith.maximumf %13, %14 : vector<8x128xf32>
    %16 = arith.truncf %15 : vector<8x128xf32> to vector<8x128xbf16>
    %c0_12 = arith.constant 0 : index
    %c0_13 = arith.constant 0 : index
    %17 = vector.load %arg6[%c0_12, %c0_13] : memref<128x128xbf16, #tpu.memory_space<vmem>>, vector<128x128xbf16>
    %cst_14 = arith.constant dense<0.000000e+00> : vector<8x128xf32>
    %18 = tpu.matmul %16, %17, %cst_14 {dimension_numbers = #tpu.dot_dimension_numbers<[1], [0], [0], [1], [0, 0, 1, 1], [], []>} : vector<8x128xbf16>, vector<128x128xbf16>, vector<8x128xf32> -> vector<8x128xf32>
    %c0_15 = arith.constant 0 : index
    %c0_16 = arith.constant 0 : index
    %19 = vector.load %arg7[%c0_15, %c0_16] : memref<1x128xf32, #tpu.memory_space<vmem>>, vector<1x128xf32>
    %20 = vector.broadcast %19 : vector<1x128xf32> to vector<8x128xf32>
    %21 = arith.addf %18, %20 : vector<8x128xf32>
    %cst_17 = arith.constant 0.000000e+00 : f32
    %22 = vector.broadcast %cst_17 : f32 to vector<8x128xf32>
    %23 = arith.maximumf %21, %22 : vector<8x128xf32>
    %c0_18 = arith.constant 0 : index
    %c0_19 = arith.constant 0 : index
    %24 = vector.load %arg8[%c0_18, %c0_19] : memref<8x128xf32, #tpu.memory_space<vmem>>, vector<8x128xf32>
    tpu.vector_store %arg8[%c0_18, %c0_19], %23 {strides = array<i32>} : memref<8x128xf32, #tpu.memory_space<vmem>>, vector<8x128xf32>,
    return
  }
  func.func @transform_0(%arg0: i32) -> (i32, i32) {
    %c0_i32 = arith.constant 0 : i32
    %c0_i32_0 = arith.constant 0 : i32
    return %arg0, %c0_i32 : i32, i32
  }
  func.func @transform_1(%arg0: i32) -> (i32, i32) {
    %c0_i32 = arith.constant 0 : i32
    %c0_i32_0 = arith.constant 0 : i32
    %c0_i32_1 = arith.constant 0 : i32
    return %c0_i32, %c0_i32_0 : i32, i32
  }
  func.func @transform_2(%arg0: i32) -> (i32, i32) {
    %c0_i32 = arith.constant 0 : i32
    %c0_i32_0 = arith.constant 0 : i32
    %c0_i32_1 = arith.constant 0 : i32
    return %c0_i32, %c0_i32_0 : i32, i32
  }
  func.func @transform_3(%arg0: i32) -> (i32, i32) {
    %c0_i32 = arith.constant 0 : i32
    %c0_i32_0 = arith.constant 0 : i32
    %c0_i32_1 = arith.constant 0 : i32
    return %c0_i32, %c0_i32_0 : i32, i32
  }
  func.func @transform_4(%arg0: i32) -> (i32, i32) {
    %c0_i32 = arith.constant 0 : i32
    %c0_i32_0 = arith.constant 0 : i32
    %c0_i32_1 = arith.constant 0 : i32
    return %c0_i32, %c0_i32_0 : i32, i32
  }
  func.func @transform_5(%arg0: i32) -> (i32, i32) {
    %c0_i32 = arith.constant 0 : i32
    %c0_i32_0 = arith.constant 0 : i32
    %c0_i32_1 = arith.constant 0 : i32
    return %c0_i32, %c0_i32_0 : i32, i32
  }
  func.func @transform_6(%arg0: i32) -> (i32, i32) {
    %c0_i32 = arith.constant 0 : i32
    %c0_i32_0 = arith.constant 0 : i32
    %c0_i32_1 = arith.constant 0 : i32
    return %c0_i32, %c0_i32_0 : i32, i32
  }
  func.func @transform_7(%arg0: i32) -> (i32, i32) {
    %c0_i32 = arith.constant 0 : i32
    %c0_i32_0 = arith.constant 0 : i32
    return %arg0, %c0_i32 : i32, i32
  }
}

</mosaic_0001>

<llo_original>
// kernel: tpu_custom_call.1
$region0: #{tpu_custom_call.1}
  #allocation0 [shape = 'u32[]', space=smem, size = 0x4, offset = 0x4, fixed_abs, tag = 'smem constant byte address 0x4 - core index']
  #allocation1 [shape = 'u32[144,128]{1,0:T(1,128)}', space=vmem, size = 0x12000, scoped, tag = 'internal scratch']
  %s0 = inlined_call_operand.hbm [shape: bf16[8,400], index: 0, kind: input, shape index: {}]
  %s1 = inlined_call_operand.hbm [shape: bf16[400,128], index: 1, kind: input, shape index: {}]
  %s2 = inlined_call_operand.vmem [shape: f32[1,128], index: 2, kind: input, shape index: {}]
  %s3 = inlined_call_operand.hbm [shape: bf16[128,128], index: 3, kind: input, shape index: {}]
  %s4 = inlined_call_operand.vmem [shape: f32[1,128], index: 4, kind: input, shape index: {}]
  %s5 = inlined_call_operand.hbm [shape: bf16[128,128], index: 5, kind: input, shape index: {}]
  %s6 = inlined_call_operand.vmem [shape: f32[1,128], index: 6, kind: input, shape index: {}]
  %s7 = inlined_call_operand.hbm [shape: f32[8,128], index: 7, kind: output, shape index: {}]
  %s8 = sld [smem:[#allocation0]]
  $region54: #{tpu_custom_call.1} parent=0
    _
  %s10 = ssub.s32 1, %s8
  %s11 = scalar_select 0, %s10, %s8
  $region1: #{tpu_custom_call.1} parent=0
    #allocation2 [shape = 'u8[8192]{0}', space=vmem, size = 0x2000, scoped, tag = 'input window, operand 0, single buffered']
    #allocation3 [shape = 's32[1]{0}', space=sflag, size = 0x4, scoped, tag = 'scoped memory for tpu_custom_call.1']
    #allocation4 [shape = 's32[1]{0}', space=sflag, size = 0x4, scoped, tag = 'scoped memory for tpu_custom_call.1']
    #allocation5 [shape = 'u8[102400]{0}', space=vmem, size = 0x19000, scoped, tag = 'input window, operand 1, single buffered']
    #allocation6 [shape = 's32[1]{0}', space=sflag, size = 0x4, scoped, tag = 'scoped memory for tpu_custom_call.1']
    #allocation7 [shape = 'u8[32768]{0}', space=vmem, size = 0x8000, scoped, tag = 'input window, operand 3, single buffered']
    #allocation8 [shape = 'u8[32768]{0}', space=vmem, size = 0x8000, scoped, tag = 'input window, operand 5, single buffered']
    #allocation9 [shape = 's32[1]{0}', space=sflag, size = 0x4, scoped, tag = 'scoped memory for tpu_custom_call.1']
    #allocation10 [shape = 'u8[4096]{0}', space=vmem, size = 0x1000, scoped, tag = 'output window, operand 0, single buffered']
    %12 = vsyncpa [#allocation3], 0
    %13 = vsyncpa [#allocation6], 0
    %14 = vsyncpa [#allocation9], 0
    %15 = vsyncpa [#allocation4], 0
    // Predicated region
    $region2: #{tpu_custom_call.1} parent=1 // pred_check
      _
    $region3: #{tpu_custom_call.1} parent=1 // pred_check_branch
      %17 = sbr.rel (0) target = $region5
    $region4: #{tpu_custom_call.1} parent=1 // pred_region
      %s19 = ssub.s32 256, 256
      %20 = vsyncadd [#allocation3], %s19
      %s22 = sshll.u32 [#allocation2], 4
      %s23 = int_to_ptr.vmem [resolvable:$true] %s22
      %25 = dma.hbm_to_vmem [thread:$0]  %s0, 256, %s23, [#allocation3]
    $region5: #{tpu_custom_call.1} parent=1 // pred_fallthru
      _
    // Predicated region
    $region6: #{tpu_custom_call.1} parent=1 // pred_check
      _
    $region7: #{tpu_custom_call.1} parent=1 // pred_check_branch
      %27 = sbr.rel (0) target = $region9
    $region8: #{tpu_custom_call.1} parent=1 // pred_region
      %s29 = ssub.s32 3200, 3200
      %30 = vsyncadd [#allocation6], %s29
      %s31 = sshll.u32 [#allocation5], 4
      %s32 = int_to_ptr.vmem [resolvable:$true] %s31
      %37 = dma.hbm_to_vmem [thread:$0]  %s1, 3200, %s32, [#allocation6], 64, 64, 4
    $region9: #{tpu_custom_call.1} parent=1 // pred_fallthru
      _
    // Predicated region
    $region10: #{tpu_custom_call.1} parent=1 // pred_check
      _
    $region11: #{tpu_custom_call.1} parent=1 // pred_check_branch
      %39 = sbr.rel (0) target = $region13
    $region12: #{tpu_custom_call.1} parent=1 // pred_region
      _
    $region13: #{tpu_custom_call.1} parent=1 // pred_fallthru
      _
    // Predicated region
    $region14: #{tpu_custom_call.1} parent=1 // pred_check
      _
    $region15: #{tpu_custom_call.1} parent=1 // pred_check_branch
      %41 = sbr.rel (0) target = $region17
    $region16: #{tpu_custom_call.1} parent=1 // pred_region
      %s43 = ssub.s32 1024, 1024
      %44 = vsyncadd [#allocation6], %s43
      %s45 = sshll.u32 [#allocation7], 4
      %s46 = int_to_ptr.vmem [resolvable:$true] %s45
      %51 = dma.hbm_to_vmem [thread:$0]  %s3, 1024, %s46, [#allocation6], 64, 64, 4
    $region17: #{tpu_custom_call.1} parent=1 // pred_fallthru
      _
    // Predicated region
    $region18: #{tpu_custom_call.1} parent=1 // pred_check
      _
    $region19: #{tpu_custom_call.1} parent=1 // pred_check_branch
      %53 = sbr.rel (0) target = $region21
    $region20: #{tpu_custom_call.1} parent=1 // pred_region
      _
    $region21: #{tpu_custom_call.1} parent=1 // pred_fallthru
      _
    // Predicated region
    $region22: #{tpu_custom_call.1} parent=1 // pred_check
      _
    $region23: #{tpu_custom_call.1} parent=1 // pred_check_branch
      %55 = sbr.rel (0) target = $region25
    $region24: #{tpu_custom_call.1} parent=1 // pred_region
      %s57 = ssub.s32 1024, 1024
      %58 = vsyncadd [#allocation9], %s57
      %s59 = sshll.u32 [#allocation8], 4
      %s60 = int_to_ptr.vmem [resolvable:$true] %s59
      %65 = dma.hbm_to_vmem [thread:$0]  %s5, 1024, %s60, [#allocation9], 64, 64, 4
    $region25: #{tpu_custom_call.1} parent=1 // pred_fallthru
      _
    // Predicated region
    $region26: #{tpu_custom_call.1} parent=1 // pred_check
      _
    $region27: #{tpu_custom_call.1} parent=1 // pred_check_branch
      %67 = sbr.rel (0) target = $region29
    $region28: #{tpu_custom_call.1} parent=1 // pred_region
      _
    $region29: #{tpu_custom_call.1} parent=1 // pred_fallthru
      _
    // Predicated region
    $region30: #{tpu_custom_call.1} parent=1 // pred_check
      _
    $region31: #{tpu_custom_call.1} parent=1 // pred_check_branch
      %69 = sbr.rel (0) target = $region33
    $region32: #{tpu_custom_call.1} parent=1 // pred_region
      %70 = dma.done [#allocation3], 256
    $region33: #{tpu_custom_call.1} parent=1 // pred_fallthru
      _
    // Predicated region
    $region34: #{tpu_custom_call.1} parent=1 // pred_check
      _
    $region35: #{tpu_custom_call.1} parent=1 // pred_check_branch
      %72 = sbr.rel (0) target = $region37
    $region36: #{tpu_custom_call.1} parent=1 // pred_region
      %73 = dma.done [#allocation6], 3200
    $region37: #{tpu_custom_call.1} parent=1 // pred_fallthru
      _
    // Predicated region
    $region38: #{tpu_custom_call.1} parent=1 // pred_check
      _
    $region39: #{tpu_custom_call.1} parent=1 // pred_check_branch
      %75 = sbr.rel (0) target = $region41
    $region40: #{tpu_custom_call.1} parent=1 // pred_region
      %76 = dma.done [#allocation6], 1024
    $region41: #{tpu_custom_call.1} parent=1 // pred_fallthru
      _
    // Predicated region
    $region42: #{tpu_custom_call.1} parent=1 // pred_check
      _
    $region43: #{tpu_custom_call.1} parent=1 // pred_check_branch
      %78 = sbr.rel (0) target = $region45
    $region44: #{tpu_custom_call.1} parent=1 // pred_region
      %79 = dma.done [#allocation9], 1024
    $region45: #{tpu_custom_call.1} parent=1 // pred_fallthru
      _
    %v81 = vld [vmem:[#allocation2] sm:$0xff]
    %v82 = vld [vmem:[#allocation2 + $0x8] sm:$0xff]
    %v83 = vld [vmem:[#allocation5] sm:$0xf]
    %v84 = vld [vmem:[#allocation5 + $0x4] sm:$0xf]
    %v85 = vld [vmem:[#allocation5 + $0x8] sm:$0xf]
    %v86 = vld [vmem:[#allocation5 + $0xc] sm:$0xf]
    %v87 = vld [vmem:[#allocation5 + $0x10] sm:$0xf]
    %v88 = vld [vmem:[#allocation5 + $0x14] sm:$0xf]
    %v89 = vld [vmem:[#allocation5 + $0x18] sm:$0xf]
    %v90 = vld [vmem:[#allocation5 + $0x1c] sm:$0xf]
    %v91 = vld [vmem:[#allocation5 + $0x20] sm:$0xf]
    %v92 = vld [vmem:[#allocation5 + $0x24] sm:$0xf]
    %v93 = vld [vmem:[#allocation5 + $0x28] sm:$0xf]
    %v94 = vld [vmem:[#allocation5 + $0x2c] sm:$0xf]
    %v95 = vld [vmem:[#allocation5 + $0x30] sm:$0xf]
    %v96 = vld [vmem:[#allocation5 + $0x34] sm:$0xf]
    %v97 = vld [vmem:[#allocation5 + $0x38] sm:$0xf]
    %v98 = vld [vmem:[#allocation5 + $0x3c] sm:$0xf]
    %v99 = vld [vmem:[#allocation5 + $0x40] sm:$0xf]
    %v100 = vld [vmem:[#allocation5 + $0x44] sm:$0xf]
    %v101 = vld [vmem:[#allocation5 + $0x48] sm:$0xf]
    %v102 = vld [vmem:[#allocation5 + $0x4c] sm:$0xf]
    %v103 = vld [vmem:[#allocation5 + $0x50] sm:$0xf]
    %v104 = vld [vmem:[#allocation5 + $0x54] sm:$0xf]
    %v105 = vld [vmem:[#allocation5 + $0x58] sm:$0xf]
    %v106 = vld [vmem:[#allocation5 + $0x5c] sm:$0xf]
    %v107 = vld [vmem:[#allocation5 + $0x60] sm:$0xf]
    %v108 = vld [vmem:[#allocation5 + $0x64] sm:$0xf]
    %v109 = vld [vmem:[#allocation5 + $0x68] sm:$0xf]
    %v110 = vld [vmem:[#allocation5 + $0x6c] sm:$0xf]
    %v111 = vld [vmem:[#allocation5 + $0x70] sm:$0xf]
    %v112 = vld [vmem:[#allocation5 + $0x74] sm:$0xf]
    %v113 = vld [vmem:[#allocation5 + $0x78] sm:$0xf]
    %v114 = vld [vmem:[#allocation5 + $0x7c] sm:$0xf]
    %v115 = vld [vmem:[#allocation5 + $0x80] sm:$0xf]
    %v116 = vld [vmem:[#allocation5 + $0x84] sm:$0xf]
    %v117 = vld [vmem:[#allocation5 + $0x88] sm:$0xf]
    %v118 = vld [vmem:[#allocation5 + $0x8c] sm:$0xf]
    %v119 = vld [vmem:[#allocation5 + $0x90] sm:$0xf]
    %v120 = vld [vmem:[#allocation5 + $0x94] sm:$0xf]
    %v121 = vld [vmem:[#allocation5 + $0x98] sm:$0xf]
    %v122 = vld [vmem:[#allocation5 + $0x9c] sm:$0xf]
    %v123 = vld [vmem:[#allocation5 + $0xa0] sm:$0xf]
    %v124 = vld [vmem:[#allocation5 + $0xa4] sm:$0xf]
    %v125 = vld [vmem:[#allocation5 + $0xa8] sm:$0xf]
    %v126 = vld [vmem:[#allocation5 + $0xac] sm:$0xf]
    %v127 = vld [vmem:[#allocation5 + $0xb0] sm:$0xf]
    %v128 = vld [vmem:[#allocation5 + $0xb4] sm:$0xf]
    %v129 = vld [vmem:[#allocation5 + $0xb8] sm:$0xf]
    %v130 = vld [vmem:[#allocation5 + $0xbc] sm:$0xf]
    %v131 = vld [vmem:[#allocation5 + $0xc0] sm:$0xf]
    %v132 = vld [vmem:[#allocation5 + $0xc4] sm:$0xf]
    %v133 = vld [vmem:[%s2] sm:$0x1]
    %v135 = vlaneseq
    %v136 = vshrl.u32 %v135, 7
    %v137 = vsub.s32 0, %v136
    %v138 = vrot.slane %v133, %v137
    %v142 = vunpack.c.l.b16 %v81
    %v143 = vunpack.c.h.b16 %v81
    %v144 = vunpack.c.l.b16 %v82
    %v145 = vunpack.c.h.b16 %v82
    %v146 = vpack.c.b16 %v142, %v142
    %v147 = vpack.c.b16 %v143, %v143
    %v148 = vpack.c.b16 %v144, %v144
    %v149 = vpack.c.b16 %v145, %v145
    %v203 = vunpack.c.l.b16 %v83
    %v204 = vunpack.c.l.b16 %v84
    %v205 = vunpack.c.l.b16 %v85
    %v206 = vunpack.c.l.b16 %v86
    %v207 = vunpack.c.l.b16 %v87
    %v208 = vunpack.c.l.b16 %v88
    %v209 = vunpack.c.l.b16 %v89
    %v210 = vunpack.c.l.b16 %v90
    %v211 = vunpack.c.l.b16 %v91
    %v212 = vunpack.c.l.b16 %v92
    %v213 = vunpack.c.l.b16 %v93
    %v214 = vunpack.c.l.b16 %v94
    %v215 = vunpack.c.l.b16 %v95
    %v216 = vunpack.c.l.b16 %v96
    %v217 = vunpack.c.l.b16 %v97
    %v218 = vunpack.c.l.b16 %v98
    %v219 = vunpack.c.l.b16 %v99
    %v220 = vunpack.c.l.b16 %v100
    %v221 = vunpack.c.l.b16 %v101
    %v222 = vunpack.c.l.b16 %v102
    %v223 = vunpack.c.l.b16 %v103
    %v224 = vunpack.c.l.b16 %v104
    %v225 = vunpack.c.l.b16 %v105
    %v226 = vunpack.c.l.b16 %v106
    %v227 = vunpack.c.l.b16 %v107
    %v228 = vunpack.c.l.b16 %v108
    %v229 = vunpack.c.l.b16 %v109
    %v230 = vunpack.c.l.b16 %v110
    %v231 = vunpack.c.l.b16 %v111
    %v232 = vunpack.c.l.b16 %v112
    %v233 = vunpack.c.l.b16 %v113
    %v234 = vunpack.c.l.b16 %v114
    %v235 = vunpack.c.l.b16 %v115
    %v236 = vunpack.c.l.b16 %v116
    %v237 = vunpack.c.l.b16 %v117
    %v238 = vunpack.c.l.b16 %v118
    %v239 = vunpack.c.l.b16 %v119
    %v240 = vunpack.c.l.b16 %v120
    %v241 = vunpack.c.l.b16 %v121
    %v242 = vunpack.c.l.b16 %v122
    %v243 = vunpack.c.l.b16 %v123
    %v244 = vunpack.c.l.b16 %v124
    %v245 = vunpack.c.l.b16 %v125
    %v246 = vunpack.c.l.b16 %v126
    %v247 = vunpack.c.l.b16 %v127
    %v248 = vunpack.c.l.b16 %v128
    %v249 = vunpack.c.l.b16 %v129
    %v250 = vunpack.c.l.b16 %v130
    %v251 = vunpack.c.l.b16 %v131
    %v252 = vunpack.c.l.b16 %v132
    %v253 = vpack.c.b16 %v204, %v203
    %v254 = vpack.c.b16 %v206, %v205
    %v255 = vpack.c.b16 %v208, %v207
    %v256 = vpack.c.b16 %v210, %v209
    %v257 = vpack.c.b16 %v212, %v211
    %v258 = vpack.c.b16 %v214, %v213
    %v259 = vpack.c.b16 %v216, %v215
    %v260 = vpack.c.b16 %v218, %v217
    %v261 = vpack.c.b16 %v220, %v219
    %v262 = vpack.c.b16 %v222, %v221
    %v263 = vpack.c.b16 %v224, %v223
    %v264 = vpack.c.b16 %v226, %v225
    %v265 = vpack.c.b16 %v228, %v227
    %v266 = vpack.c.b16 %v230, %v229
    %v267 = vpack.c.b16 %v232, %v231
    %v268 = vpack.c.b16 %v234, %v233
    %v269 = vpack.c.b16 %v236, %v235
    %v270 = vpack.c.b16 %v238, %v237
    %v271 = vpack.c.b16 %v240, %v239
    %v272 = vpack.c.b16 %v242, %v241
    %v273 = vpack.c.b16 %v244, %v243
    %v274 = vpack.c.b16 %v246, %v245
    %v275 = vpack.c.b16 %v248, %v247
    %v276 = vpack.c.b16 %v250, %v249
    %v277 = vpack.c.b16 %v252, %v251
    %vm303 = vcmask 130048
    %v305 = vsel %vm303, %v149, 0
    %307 = vmatprep.subr.bf16.mxu0 0
    %308 = vmatpush1.bf16.msra.mxu0 %v253
    %309 = vmatprep.subr.bf16.mxu0 0
    %310 = vmatpush1.bf16.msra.mxu0 %v254
    %311 = vmatprep.subr.bf16.mxu0 0
    %312 = vmatpush1.bf16.msra.mxu0 %v255
    %313 = vmatprep.subr.bf16.mxu0 0
    %314 = vmatpush1.bf16.msra.mxu0 %v256
    %315 = vmatprep.subr.bf16.mxu0 0
    %316 = vmatpush1.bf16.msra.mxu0 %v257
    %317 = vmatprep.subr.bf16.mxu0 0
    %318 = vmatpush1.bf16.msra.mxu0 %v258
    %319 = vmatprep.subr.bf16.mxu0 0
    %320 = vmatpush1.bf16.msra.mxu0 %v259
    %321 = vmatprep.subr.bf16.mxu0 0
    %322 = vmatpush1.bf16.msra.mxu0 %v260
    %323 = vmatprep.subr.bf16.mxu0 0
    %324 = vmatpush1.bf16.msra.mxu0 %v261
    %325 = vmatprep.subr.bf16.mxu0 0
    %326 = vmatpush1.bf16.msra.mxu0 %v262
    %327 = vmatprep.subr.bf16.mxu0 0
    %328 = vmatpush1.bf16.msra.mxu0 %v263
    %329 = vmatprep.subr.bf16.mxu0 0
    %330 = vmatpush1.bf16.msra.mxu0 %v264
    %331 = vmatprep.subr.bf16.mxu0 0
    %332 = vmatpush1.bf16.msra.mxu0 %v265
    %333 = vmatprep.subr.bf16.mxu0 0
    %334 = vmatpush1.bf16.msra.mxu0 %v266
    %335 = vmatprep.subr.bf16.mxu0 0
    %336 = vmatpush1.bf16.msra.mxu0 %v267
    %337 = vmatprep.subr.bf16.mxu0 0
    %338 = vmatpush1.bf16.msra.mxu0 %v268
    %339 = vmatprep.mubr.bf16.mxu0 %v147
    %340 = vmatmul.mubr.bf16.gmra.mrb[0].mxu0 %v146
    %v341 = vpop.f32.mrb[0].mxu0
    %v342 = vadd.f32 %v138, %v341
    %v343 = vpop.f32.mrb[0].mxu0
    %v344 = vpop.f32.mrb[0].mxu0
    %v345 = vpop.f32.mrb[0].mxu0
    %346 = vdwg.mxu0
    %347 = vmatprep.subr.bf16.mxu0 0
    %348 = vmatpush1.bf16.msra.mxu0 %v269
    %349 = vmatprep.subr.bf16.mxu0 0
    %350 = vmatpush1.bf16.msra.mxu0 %v270
    %351 = vmatprep.subr.bf16.mxu0 0
    %352 = vmatpush1.bf16.msra.mxu0 %v271
    %353 = vmatprep.subr.bf16.mxu0 0
    %354 = vmatpush1.bf16.msra.mxu0 %v272
    %355 = vmatprep.subr.bf16.mxu0 0
    %356 = vmatpush1.bf16.msra.mxu0 %v273
    %357 = vmatprep.subr.bf16.mxu0 0
    %358 = vmatpush1.bf16.msra.mxu0 %v274
    %359 = vmatprep.subr.bf16.mxu0 0
    %360 = vmatpush1.bf16.msra.mxu0 %v275
    %361 = vmatprep.subr.bf16.mxu0 0
    %362 = vmatpush1.bf16.msra.mxu0 %v276
    %363 = vmatprep.subr.bf16.mxu0 0
    %364 = vmatpush1.bf16.msra.mxu0 %v277
    %365 = vmatprep.subr.bf16.mxu0 0
    %366 = vmatpush1.bf16.msra.mxu0 0
    %367 = vmatprep.subr.bf16.mxu0 0
    %368 = vmatpush1.bf16.msra.mxu0 0
    %369 = vmatprep.subr.bf16.mxu0 0
    %370 = vmatpush1.bf16.msra.mxu0 0
    %371 = vmatprep.subr.bf16.mxu0 0
    %372 = vmatpush1.bf16.msra.mxu0 0
    %373 = vmatprep.subr.bf16.mxu0 0
    %374 = vmatpush1.bf16.msra.mxu0 0
    %375 = vmatprep.subr.bf16.mxu0 0
    %376 = vmatpush1.bf16.msra.mxu0 0
    %377 = vmatprep.subr.bf16.mxu0 0
    %378 = vmatpush1.bf16.msra.mxu0 0
    %379 = vmatprep.mubr.bf16.mxu0 %v305
    %380 = vmatmul.mubr.bf16.gmra.mrb[0].mxu0 %v148
    %v381 = vpop.f32.mrb[0].mxu0
    %v382 = vadd.f32 %v342, %v381
    %v383 = vpop.f32.mrb[0].mxu0
    %v384 = vpop.f32.mrb[0].mxu0
    %v385 = vpop.f32.mrb[0].mxu0
    %386 = vdwg.mxu0
    %v387 = vmax.f32 %v382, 0.0
    %v388 = vpack.c.bf16 %v387, %v387
    %v389 = vld [vmem:[#allocation7] sm:$0xf]
    %v390 = vld [vmem:[#allocation7 + $0x4] sm:$0xf]
    %v391 = vld [vmem:[#allocation7 + $0x8] sm:$0xf]
    %v392 = vld [vmem:[#allocation7 + $0xc] sm:$0xf]
    %v393 = vld [vmem:[#allocation7 + $0x10] sm:$0xf]
    %v394 = vld [vmem:[#allocation7 + $0x14] sm:$0xf]
    %v395 = vld [vmem:[#allocation7 + $0x18] sm:$0xf]
    %v396 = vld [vmem:[#allocation7 + $0x1c] sm:$0xf]
    %v397 = vld [vmem:[#allocation7 + $0x20] sm:$0xf]
    %v398 = vld [vmem:[#allocation7 + $0x24] sm:$0xf]
    %v399 = vld [vmem:[#allocation7 + $0x28] sm:$0xf]
    %v400 = vld [vmem:[#allocation7 + $0x2c] sm:$0xf]
    %v401 = vld [vmem:[#allocation7 + $0x30] sm:$0xf]
    %v402 = vld [vmem:[#allocation7 + $0x34] sm:$0xf]
    %v403 = vld [vmem:[#allocation7 + $0x38] sm:$0xf]
    %v404 = vld [vmem:[#allocation7 + $0x3c] sm:$0xf]
    %v405 = vld [vmem:[%s4] sm:$0x1]
    %v407 = vlaneseq
    %v408 = vshrl.u32 %v407, 7
    %v409 = vsub.s32 0, %v408
    %v410 = vrot.slane %v405, %v409
    %v428 = vunpack.c.l.b16 %v389
    %v429 = vunpack.c.l.b16 %v390
    %v430 = vunpack.c.l.b16 %v391
    %v431 = vunpack.c.l.b16 %v392
    %v432 = vunpack.c.l.b16 %v393
    %v433 = vunpack.c.l.b16 %v394
    %v434 = vunpack.c.l.b16 %v395
    %v435 = vunpack.c.l.b16 %v396
    %v436 = vunpack.c.l.b16 %v397
    %v437 = vunpack.c.l.b16 %v398
    %v438 = vunpack.c.l.b16 %v399
    %v439 = vunpack.c.l.b16 %v400
    %v440 = vunpack.c.l.b16 %v401
    %v441 = vunpack.c.l.b16 %v402
    %v442 = vunpack.c.l.b16 %v403
    %v443 = vunpack.c.l.b16 %v404
    %v444 = vpack.c.b16 %v429, %v428
    %v445 = vpack.c.b16 %v431, %v430
    %v446 = vpack.c.b16 %v433, %v432
    %v447 = vpack.c.b16 %v435, %v434
    %v448 = vpack.c.b16 %v437, %v436
    %v449 = vpack.c.b16 %v439, %v438
    %v450 = vpack.c.b16 %v441, %v440
    %v451 = vpack.c.b16 %v443, %v442
    %460 = vmatprep.subr.bf16.mxu0 0
    %461 = vmatpush1.bf16.msra.mxu0 %v444
    %462 = vmatprep.subr.bf16.mxu0 0
    %463 = vmatpush1.bf16.msra.mxu0 %v445
    %464 = vmatprep.subr.bf16.mxu0 0
    %465 = vmatpush1.bf16.msra.mxu0 %v446
    %466 = vmatprep.subr.bf16.mxu0 0
    %467 = vmatpush1.bf16.msra.mxu0 %v447
    %468 = vmatprep.subr.bf16.mxu0 0
    %469 = vmatpush1.bf16.msra.mxu0 %v448
    %470 = vmatprep.subr.bf16.mxu0 0
    %471 = vmatpush1.bf16.msra.mxu0 %v449
    %472 = vmatprep.subr.bf16.mxu0 0
    %473 = vmatpush1.bf16.msra.mxu0 %v450
    %474 = vmatprep.subr.bf16.mxu0 0
    %475 = vmatpush1.bf16.msra.mxu0 %v451
    %476 = vmatprep.subr.bf16.mxu0 0
    %477 = vmatpush1.bf16.msra.mxu0 0
    %478 = vmatprep.subr.bf16.mxu0 0
    %479 = vmatpush1.bf16.msra.mxu0 0
    %480 = vmatprep.subr.bf16.mxu0 0
    %481 = vmatpush1.bf16.msra.mxu0 0
    %482 = vmatprep.subr.bf16.mxu0 0
    %483 = vmatpush1.bf16.msra.mxu0 0
    %484 = vmatprep.subr.bf16.mxu0 0
    %485 = vmatpush1.bf16.msra.mxu0 0
    %486 = vmatprep.subr.bf16.mxu0 0
    %487 = vmatpush1.bf16.msra.mxu0 0
    %488 = vmatprep.subr.bf16.mxu0 0
    %489 = vmatpush1.bf16.msra.mxu0 0
    %490 = vmatprep.subr.bf16.mxu0 0
    %491 = vmatpush1.bf16.msra.mxu0 0
    %492 = vmatprep.mubr.bf16.mxu0 0
    %493 = vmatmul.mubr.bf16.gmra.mrb[0].mxu0 %v388
    %v494 = vpop.f32.mrb[0].mxu0
    %v495 = vadd.f32 %v410, %v494
    %v496 = vpop.f32.mrb[0].mxu0
    %v497 = vpop.f32.mrb[0].mxu0
    %v498 = vpop.f32.mrb[0].mxu0
    %499 = vdwg.mxu0
    %v500 = vmax.f32 %v495, 0.0
    %v501 = vpack.c.bf16 %v500, %v500
    %v502 = vld [vmem:[#allocation8] sm:$0xf]
    %v503 = vld [vmem:[#allocation8 + $0x4] sm:$0xf]
    %v504 = vld [vmem:[#allocation8 + $0x8] sm:$0xf]
    %v505 = vld [vmem:[#allocation8 + $0xc] sm:$0xf]
    %v506 = vld [vmem:[#allocation8 + $0x10] sm:$0xf]
    %v507 = vld [vmem:[#allocation8 + $0x14] sm:$0xf]
    %v508 = vld [vmem:[#allocation8 + $0x18] sm:$0xf]
    %v509 = vld [vmem:[#allocation8 + $0x1c] sm:$0xf]
    %v510 = vld [vmem:[#allocation8 + $0x20] sm:$0xf]
    %v511 = vld [vmem:[#allocation8 + $0x24] sm:$0xf]
    %v512 = vld [vmem:[#allocation8 + $0x28] sm:$0xf]
    %v513 = vld [vmem:[#allocation8 + $0x2c] sm:$0xf]
    %v514 = vld [vmem:[#allocation8 + $0x30] sm:$0xf]
    %v515 = vld [vmem:[#allocation8 + $0x34] sm:$0xf]
    %v516 = vld [vmem:[#allocation8 + $0x38] sm:$0xf]
    %v517 = vld [vmem:[#allocation8 + $0x3c] sm:$0xf]
    %v518 = vld [vmem:[%s6] sm:$0x1]
    %v520 = vlaneseq
    %v521 = vshrl.u32 %v520, 7
    %v522 = vsub.s32 0, %v521
    %v523 = vrot.slane %v518, %v522
    %v541 = vunpack.c.l.b16 %v502
    %v542 = vunpack.c.l.b16 %v503
    %v543 = vunpack.c.l.b16 %v504
    %v544 = vunpack.c.l.b16 %v505
    %v545 = vunpack.c.l.b16 %v506
    %v546 = vunpack.c.l.b16 %v507
    %v547 = vunpack.c.l.b16 %v508
    %v548 = vunpack.c.l.b16 %v509
    %v549 = vunpack.c.l.b16 %v510
    %v550 = vunpack.c.l.b16 %v511
    %v551 = vunpack.c.l.b16 %v512
    %v552 = vunpack.c.l.b16 %v513
    %v553 = vunpack.c.l.b16 %v514
    %v554 = vunpack.c.l.b16 %v515
    %v555 = vunpack.c.l.b16 %v516
    %v556 = vunpack.c.l.b16 %v517
    %v557 = vpack.c.b16 %v542, %v541
    %v558 = vpack.c.b16 %v544, %v543
    %v559 = vpack.c.b16 %v546, %v545
    %v560 = vpack.c.b16 %v548, %v547
    %v561 = vpack.c.b16 %v550, %v549
    %v562 = vpack.c.b16 %v552, %v551
    %v563 = vpack.c.b16 %v554, %v553
    %v564 = vpack.c.b16 %v556, %v555
    %573 = vmatprep.subr.bf16.mxu0 0
    %574 = vmatpush1.bf16.msra.mxu0 %v557
    %575 = vmatprep.subr.bf16.mxu0 0
    %576 = vmatpush1.bf16.msra.mxu0 %v558
    %577 = vmatprep.subr.bf16.mxu0 0
    %578 = vmatpush1.bf16.msra.mxu0 %v559
    %579 = vmatprep.subr.bf16.mxu0 0
    %580 = vmatpush1.bf16.msra.mxu0 %v560
    %581 = vmatprep.subr.bf16.mxu0 0
    %582 = vmatpush1.bf16.msra.mxu0 %v561
    %583 = vmatprep.subr.bf16.mxu0 0
    %584 = vmatpush1.bf16.msra.mxu0 %v562
    %585 = vmatprep.subr.bf16.mxu0 0
    %586 = vmatpush1.bf16.msra.mxu0 %v563
    %587 = vmatprep.subr.bf16.mxu0 0
    %588 = vmatpush1.bf16.msra.mxu0 %v564
    %589 = vmatprep.subr.bf16.mxu0 0
    %590 = vmatpush1.bf16.msra.mxu0 0
    %591 = vmatprep.subr.bf16.mxu0 0
    %592 = vmatpush1.bf16.msra.mxu0 0
    %593 = vmatprep.subr.bf16.mxu0 0
    %594 = vmatpush1.bf16.msra.mxu0 0
    %595 = vmatprep.subr.bf16.mxu0 0
    %596 = vmatpush1.bf16.msra.mxu0 0
    %597 = vmatprep.subr.bf16.mxu0 0
    %598 = vmatpush1.bf16.msra.mxu0 0
    %599 = vmatprep.subr.bf16.mxu0 0
    %600 = vmatpush1.bf16.msra.mxu0 0
    %601 = vmatprep.subr.bf16.mxu0 0
    %602 = vmatpush1.bf16.msra.mxu0 0
    %603 = vmatprep.subr.bf16.mxu0 0
    %604 = vmatpush1.bf16.msra.mxu0 0
    %605 = vmatprep.mubr.bf16.mxu0 0
    %606 = vmatmul.mubr.bf16.gmra.mrb[0].mxu0 %v501
    %v607 = vpop.f32.mrb[0].mxu0
    %v608 = vadd.f32 %v523, %v607
    %v609 = vpop.f32.mrb[0].mxu0
    %v610 = vpop.f32.mrb[0].mxu0
    %v611 = vpop.f32.mrb[0].mxu0
    %612 = vdwg.mxu0
    %v613 = vmax.f32 %v608, 0.0
    %614 = vst [vmem:[#allocation10] sm:$0xff] %v613
    // Predicated region
    $region46: #{tpu_custom_call.1} parent=1 // pred_check
      _
    $region47: #{tpu_custom_call.1} parent=1 // pred_check_branch
      %616 = sbr.rel (0) target = $region49
    $region48: #{tpu_custom_call.1} parent=1 // pred_region
      %s618 = ssub.s32 128, 128
      %619 = vsyncadd [#allocation4], %s618
      %s621 = sshll.u32 [#allocation10], 4
      %s622 = int_to_ptr.vmem [resolvable:$true] %s621
      %624 = dma.vmem_to_hbm [thread:$0]  %s622, 128, %s7, [#allocation4]
    $region49: #{tpu_custom_call.1} parent=1 // pred_fallthru
      _
    // Predicated region
    $region50: #{tpu_custom_call.1} parent=1 // pred_check
      _
    $region51: #{tpu_custom_call.1} parent=1 // pred_check_branch
      %626 = sbr.rel (0) target = $region53
    $region52: #{tpu_custom_call.1} parent=1 // pred_region
      %627 = dma.done [#allocation4], 128
    $region53: #{tpu_custom_call.1} parent=1 // pred_fallthru
      _
    %628 = vsyncpa [#allocation3], 1
    %629 = vsyncpa [#allocation6], 1
    %630 = vsyncpa [#allocation9], 1
    %631 = vsyncpa [#allocation4], 1

</llo_original>
